<compile_context>
chip_gen: v7x
topology: tpu7x:2x2x1
jax: 0.10.0
libtpu: 0.0.40
codegen_flags: <defaults>
</compile_context>

<pallas_src>
import jax
import jax.numpy as jnp
from jax import lax
from jax.experimental import pallas as pl
from jax.experimental.pallas import tpu as pltpu


def _tile(dim, target):
    """Largest multiple of 128 that divides `dim` and is <= target; else full dim."""
    if dim % 128 != 0:
        return dim  # full-extent block is always legal
    t = min(max(128, (target // 128) * 128), dim)
    while dim % t != 0:
        t -= 128
    return t


def hidden_kernel(x_ref, w1_ref, h_ref):
    """Accumulate hidden = X @ W1^T over V-reduction tiles, directly in the f32 output."""
    @pl.when(pl.program_id(0) == 0)
    def _():
        h_ref[...] = jnp.zeros_like(h_ref)

    # X block: [B, tk], W1 block: [E, tk] -> contract dim 1 with dim 1.
    h_ref[...] += lax.dot_general(
        x_ref[...], w1_ref[...],
        dimension_numbers=(((1,), (1,)), ((), ())),
        preferred_element_type=jnp.float32,
    )


def output_kernel(h_ref, w2_ref, o_ref):
    """One lane-dense output tile: out[:, j*tn:(j+1)*tn] = hidden @ W2_tile^T."""
    # hidden: [B, E], W2 block: [tn, E] -> contract dim 1 with dim 1.
    o_ref[...] = lax.dot_general(
        h_ref[...], w2_ref[...],
        dimension_numbers=(((1,), (1,)), ((), ())),
        preferred_element_type=jnp.float32,
    ).astype(o_ref.dtype)


def skipgram_forward(x, w1, w2, *, tk=512, tn=512):
    """x: [B, V]; w1: [E, V] (input_to_hidden.weight); w2: [V, E] (hidden_to_output.weight)."""
    B, V = x.shape
    E, Vw = w1.shape
    assert Vw == V and w2.shape == (V, E)

    tk = _tile(V, tk)   # reduction tile for the first matmul
    tn = _tile(V, tn)   # output-column tile for the second matmul
    nk = V // tk
    nj = V // tn

    # --- matmul 1: hidden[B, E] = X @ W1^T (kept in f32 between the two matmuls) ---
    hidden = pl.pallas_call(
        hidden_kernel,
        out_shape=jax.ShapeDtypeStruct((B, E), jnp.float32),
        grid_spec=pltpu.PrefetchScalarGridSpec(
            num_scalar_prefetch=0,
            grid=(nk,),
            in_specs=[
                pl.BlockSpec((B, tk), lambda k: (0, k)),   # X stream
                pl.BlockSpec((E, tk), lambda k: (0, k)),   # W1 stream
            ],
            out_specs=pl.BlockSpec((B, E), lambda k: (0, 0)),  # resident accumulator
        ),
        compiler_params=pltpu.CompilerParams(
            dimension_semantics=("arbitrary",),
        ),
    )(x, w1)

    # --- matmul 2: out[B, V] = hidden @ W2^T, tiled over V output columns ---
    out = pl.pallas_call(
        output_kernel,
        out_shape=jax.ShapeDtypeStruct((B, V), x.dtype),
        grid_spec=pltpu.PrefetchScalarGridSpec(
            num_scalar_prefetch=0,
            grid=(nj,),
            in_specs=[
                pl.BlockSpec((B, E), lambda j: (0, 0)),    # hidden resident (tiny, DMA'd once)
                pl.BlockSpec((tn, E), lambda j: (j, 0)),   # W2 stream (double-buffered)
            ],
            out_specs=pl.BlockSpec((B, tn), lambda j: (0, j)),  # lane-dense output tile
        ),
        compiler_params=pltpu.CompilerParams(
            dimension_semantics=("parallel",),  # independent tiles -> megacore-safe
        ),
    )(hidden, w2)
    return out


if __name__ == "__main__":
    # Small, TPU-tile-friendly shapes (exercise both grid axes: nk = nj = 2).
    batch = 8
    voc_size = 1024
    embedding_size = 128

    key = jax.random.PRNGKey(0)
    kx, k1, k2 = jax.random.split(key, 3)

    # Deterministic synthetic inputs/parameters (shapes match nn.Linear weights).
    x = jax.random.normal(kx, (batch, voc_size), dtype=jnp.float32)
    w1 = jax.random.normal(k1, (embedding_size, voc_size), dtype=jnp.float32) * 0.02
    w2 = jax.random.normal(k2, (voc_size, embedding_size), dtype=jnp.float32) * 0.02

    out = skipgram_forward(x, w1, w2)
    out = jax.block_until_ready(out)

    # Reference check in plain JAX (highest precision so the comparison is meaningful).
    hp = jax.lax.Precision.HIGHEST
    ref = jnp.dot(jnp.dot(x, w1.T, precision=hp), w2.T, precision=hp)
    assert out.shape == (batch, voc_size)
    assert jnp.allclose(out, ref, atol=2e-3, rtol=2e-3), float(jnp.max(jnp.abs(out - ref)))
    print("KERNEL_OK")
</pallas_src>

<mosaic_0001>
module attributes {stable_mosaic.version = 11 : i64} {
  func.func @hidden_kernel(%arg0: i32, %arg1: memref<8x512xf32, #tpu.memory_space<vmem>>, %arg2: memref<128x512xf32, #tpu.memory_space<vmem>>, %arg3: memref<8x128xf32, #tpu.memory_space<vmem>>) attributes {dimension_semantics = [#tpu.dimension_semantics<arbitrary>], iteration_bounds = array<i64: 2>, scalar_prefetch = 0 : i64, scratch_operands = 0 : i64, tpu.core_type = #tpu.core_type<tc>, window_params = [{transform_indices = @transform_0, window_bounds = array<i64: 8, 512>}, {transform_indices = @transform_1, window_bounds = array<i64: 128, 512>}, {pipeline_mode = #tpu.pipeline_mode<synchronous>, transform_indices = @transform_2, window_bounds = array<i64: 8, 128>}]} {
    %c0_i32 = arith.constant 0 : i32
    %0 = arith.cmpi eq, %arg0, %c0_i32 : i32
    %1 = arith.extui %0 : i1 to i32
    %c0_i32_0 = arith.constant 0 : i32
    %2 = arith.cmpi ne, %1, %c0_i32_0 : i32
    scf.if %2 {
      %cst_8 = arith.constant 0.000000e+00 : f32
      %9 = vector.broadcast %cst_8 : f32 to vector<8x128xf32>
      %c0_9 = arith.constant 0 : index
      %c0_10 = arith.constant 0 : index
      %10 = vector.load %arg3[%c0_9, %c0_10] : memref<8x128xf32, #tpu.memory_space<vmem>>, vector<8x128xf32>
      tpu.vector_store %arg3[%c0_9, %c0_10], %9 {strides = array<i32>} : memref<8x128xf32, #tpu.memory_space<vmem>>, vector<8x128xf32>,
    } else {
    }
    %c0 = arith.constant 0 : index
    %c0_1 = arith.constant 0 : index
    %3 = vector.load %arg3[%c0, %c0_1] : memref<8x128xf32, #tpu.memory_space<vmem>>, vector<8x128xf32>
    %c0_2 = arith.constant 0 : index
    %c0_3 = arith.constant 0 : index
    %4 = vector.load %arg1[%c0_2, %c0_3] : memref<8x512xf32, #tpu.memory_space<vmem>>, vector<8x512xf32>
    %c0_4 = arith.constant 0 : index
    %c0_5 = arith.constant 0 : index
    %5 = vector.load %arg2[%c0_4, %c0_5] : memref<128x512xf32, #tpu.memory_space<vmem>>, vector<128x512xf32>
    %cst = arith.constant dense<0.000000e+00> : vector<8x128xf32>
    %6 = tpu.matmul %4, %5, %cst {dimension_numbers = #tpu.dot_dimension_numbers<[1], [1], [0], [0], [0, 0, 1, 0], [], []>} : vector<8x512xf32>, vector<128x512xf32>, vector<8x128xf32> -> vector<8x128xf32>
    %7 = arith.addf %3, %6 : vector<8x128xf32>
    %c0_6 = arith.constant 0 : index
    %c0_7 = arith.constant 0 : index
    %8 = vector.load %arg3[%c0_6, %c0_7] : memref<8x128xf32, #tpu.memory_space<vmem>>, vector<8x128xf32>
    tpu.vector_store %arg3[%c0_6, %c0_7], %7 {strides = array<i32>} : memref<8x128xf32, #tpu.memory_space<vmem>>, vector<8x128xf32>,
    return
  }
  func.func @transform_0(%arg0: i32) -> (i32, i32) {
    %c0_i32 = arith.constant 0 : i32
    %c0_i32_0 = arith.constant 0 : i32
    return %c0_i32, %arg0 : i32, i32
  }
  func.func @transform_1(%arg0: i32) -> (i32, i32) {
    %c0_i32 = arith.constant 0 : i32
    %c0_i32_0 = arith.constant 0 : i32
    return %c0_i32, %arg0 : i32, i32
  }
  func.func @transform_2(%arg0: i32) -> (i32, i32) {
    %c0_i32 = arith.constant 0 : i32
    %c0_i32_0 = arith.constant 0 : i32
    %c0_i32_1 = arith.constant 0 : i32
    return %c0_i32, %c0_i32_0 : i32, i32
  }
}

</mosaic_0001>

<llo_original>
// kernel: tpu_custom_call.1
$region0: #{tpu_custom_call.1}
  #allocation0 [shape = 'u32[]', space=smem, size = 0x4, offset = 0x4, fixed_abs, tag = 'smem constant byte address 0x4 - core index']
  #allocation1 [shape = 'u32[144,128]{1,0:T(1,128)}', space=vmem, size = 0x12000, scoped, tag = 'internal scratch']
  %s0 = inlined_call_operand.hbm [shape: f32[8,1024], index: 0, kind: input, shape index: {}]
  %s1 = inlined_call_operand.hbm [shape: f32[128,1024], index: 1, kind: input, shape index: {}]
  %s2 = inlined_call_operand.hbm [shape: f32[8,128], index: 2, kind: output, shape index: {}]
  %s3 = sld [smem:[#allocation0]]
  $region53: #{tpu_custom_call.1} parent=0
    _
  %s5 = ssub.s32 1, %s3
  %s6 = scalar_select 0, %s5, %s3
  $region1: #{tpu_custom_call.1} parent=0
    #allocation2 [shape = 'u8[32768]{0}', space=vmem, size = 0x8000, scoped, tag = 'input window, operand 0']
    #allocation3 [shape = 's32[2]{0}', space=sflag, size = 0x8, scoped, tag = 'scoped memory for tpu_custom_call.1']
    #allocation4 [shape = 's32[2]{0}', space=sflag, size = 0x8, scoped, tag = 'scoped memory for tpu_custom_call.1']
    #allocation5 [shape = 'u8[524288]{0}', space=vmem, size = 0x80000, scoped, tag = 'input window, operand 1']
    #allocation6 [shape = 's32[2]{0}', space=sflag, size = 0x8, scoped, tag = 'scoped memory for tpu_custom_call.1']
    #allocation7 [shape = 'u8[4096]{0}', space=vmem, size = 0x1000, scoped, tag = 'output window, operand 0, single buffered']
    %7 = vsyncpa [#allocation3], 0
    %s8 = scalar_lea.sflag [#allocation3], 1
    %9 = vsyncpa %s8, 0
    %10 = vsyncpa [#allocation6], 0
    %s11 = scalar_lea.sflag [#allocation6], 1
    %12 = vsyncpa %s11, 0
    %13 = vsyncpa [#allocation4], 0
    loop: start=0, step=1, limit=4
    $region2: #{tpu_custom_call.1} parent=1 // loop_pre_header
      _
    $region3: #{tpu_custom_call.1} parent=1 // loop_header
      %s15 = sphi 0, %s19
      %p16 = scmp.ge.s32.totalorder %s15, 4
      %s25 = sphi 0, %s27
      %s28 = sphi 0, %s25
      %s29 = sphi 0, %s28
      %s45 = sphi 0, %s29
      %s51 = sphi 0, %s53
      %s54 = sphi 0, %s51
      %s55 = sphi 0, %s54
      %s71 = sphi 0, %s55
      %s75 = sphi 0, %s75
      %s77 = sphi 0, %s75
      %s78 = sphi 0, %s77
      %s92 = sphi 0, %s78
    $region4: #{tpu_custom_call.1} parent=1 // loop_header_branch
      %18 = sbr.rel (%p16) target = $region8
    $region5: #{tpu_custom_call.1} parent=1 // loop_body
      %s20 = ssub.s32 %s15, 1
      %s21 = ssub.s32 %s15, 2
      %s22 = sadd.s32 %s15, 1
      %s23 = ssub.s32 %s15, %s22
      %p24 = scmp.eq.s32.totalorder %s23, 0
      %s26 = sadd.s32 %s25, 1
      %s27 = scalar_select %p24, %s25, %s26
      %p30 = pneg %p24
      %p31 = scmp.eq.s32.totalorder %s15, 1
      %p32 = por %p30, %p31
      %p33 = scmp.ne.s32.totalorder %s25, %s28
      %p34 = scmp.eq.s32.totalorder %s15, 0
      %p35 = por %p33, %p34
      %p36 = scmp.ne.s32.totalorder %s25, %s28
      %p37 = scmp.eq.s32.totalorder %s20, 1
      %p38 = por %p36, %p37
      %p39 = scmp.ne.s32.totalorder %s28, %s29
      %p40 = scmp.eq.s32.totalorder %s20, 0
      %p41 = por %p39, %p40
      %p42 = scmp.ne.s32.totalorder %s28, %s29
      %p43 = scmp.eq.s32.totalorder %s21, 1
      %p44 = por %p42, %p43
      %p46 = scmp.ne.s32.totalorder %s29, %s45
      %p47 = scmp.eq.s32.totalorder %s21, 0
      %p48 = por %p46, %p47
      %s49 = ssub.s32 %s15, %s22
      %p50 = scmp.eq.s32.totalorder %s49, 0
      %s52 = sadd.s32 %s51, 1
      %s53 = scalar_select %p50, %s51, %s52
      %p56 = pneg %p50
      %p57 = scmp.eq.s32.totalorder %s15, 1
      %p58 = por %p56, %p57
      %p59 = scmp.ne.s32.totalorder %s51, %s54
      %p60 = scmp.eq.s32.totalorder %s15, 0
      %p61 = por %p59, %p60
      %p62 = scmp.ne.s32.totalorder %s51, %s54
      %p63 = scmp.eq.s32.totalorder %s20, 1
      %p64 = por %p62, %p63
      %p65 = scmp.ne.s32.totalorder %s54, %s55
      %p66 = scmp.eq.s32.totalorder %s20, 0
      %p67 = por %p65, %p66
      %p68 = scmp.ne.s32.totalorder %s54, %s55
      %p69 = scmp.eq.s32.totalorder %s21, 1
      %p70 = por %p68, %p69
      %p72 = scmp.ne.s32.totalorder %s55, %s71
      %p73 = scmp.eq.s32.totalorder %s21, 0
      %p74 = por %p72, %p73
      %s76 = sadd.s32 %s75, 1
      %p79 = scmp.eq.s32.totalorder %s15, 1
      %p80 = scmp.ne.s32.totalorder %s75, %s77
      %p81 = scmp.eq.s32.totalorder %s15, 0
      %p82 = por %p80, %p81
      %p83 = scmp.ne.s32.totalorder %s75, %s77
      %p84 = scmp.eq.s32.totalorder %s20, 1
      %p85 = por %p83, %p84
      %p86 = scmp.ne.s32.totalorder %s77, %s78
      %p87 = scmp.eq.s32.totalorder %s20, 0
      %p88 = por %p86, %p87
      %p89 = scmp.ne.s32.totalorder %s77, %s78
      %p90 = scmp.eq.s32.totalorder %s21, 1
      %p91 = por %p89, %p90
      %p93 = scmp.ne.s32.totalorder %s78, %s92
      %p94 = scmp.eq.s32.totalorder %s21, 0
      %p95 = por %p93, %p94
      %p96 = scmp.le.s32.totalorder 1, %s15
      %p97 = scmp.lt.s32.totalorder %s15, 3
      %p98 = pnand %p96, %p97
      %p99 = pneg %p98
      // Predicated region
      $region9: #{tpu_custom_call.1} parent=5 // pred_check
        _
      $region10: #{tpu_custom_call.1} parent=5 // pred_check_branch
        %101 = sbr.rel (%p98) target = $region12
      $region11: #{tpu_custom_call.1} parent=5 // pred_region
        %s102 = ssub.s32 %s15, 1
      $region12: #{tpu_custom_call.1} parent=5 // pred_fallthru
        _
      %p103 = scmp.lt.s32.totalorder %s15, 2
      // Predicated region
      $region13: #{tpu_custom_call.1} parent=5 // pred_check
        %p104 = pneg %p103
      $region14: #{tpu_custom_call.1} parent=5 // pred_check_branch
        %106 = sbr.rel (%p104) target = $region16
      $region15: #{tpu_custom_call.1} parent=5 // pred_region
        // Predicated region
        $region17: #{tpu_custom_call.1} parent=15 // pred_check
          %p107 = pneg %p35
        $region18: #{tpu_custom_call.1} parent=15 // pred_check_branch
          %109 = sbr.rel (%p107) target = $region20
        $region19: #{tpu_custom_call.1} parent=15 // pred_region
          %s110 = sand.u32 %s25, 1
          %s111 = scalar_lea.sflag [#allocation3], %s110
          %s112 = sand.u32 %s25, 1
          %s113 = smul.addr %s112, 32
          %s114 = scalar_lea.vmem [#allocation2], %s113
          %s115 = smul.u32 4, %s15
          %s117 = ssub.s32 512, 512
          %118 = vsyncadd %s111, %s117
          %s119 = smul.addr %s115, 128
          %s120 = scalar_lea.hbm %s0, %s119
          %s122 = sshll.u32 %s114, 4
          %s123 = int_to_ptr.vmem [resolvable:$true] %s122
          %125 = dma.hbm_to_vmem [thread:$0]  %s120, 512, %s123, %s111
        $region20: #{tpu_custom_call.1} parent=15 // pred_fallthru
          _
        // Predicated region
        $region21: #{tpu_custom_call.1} parent=15 // pred_check
          %p126 = pneg %p61
        $region22: #{tpu_custom_call.1} parent=15 // pred_check_branch
          %128 = sbr.rel (%p126) target = $region24
        $region23: #{tpu_custom_call.1} parent=15 // pred_region
          %s129 = sand.u32 %s51, 1
          %s130 = scalar_lea.sflag [#allocation6], %s129
          %s131 = sand.u32 %s51, 1
          %s132 = smul.addr %s131, 512
          %s133 = scalar_lea.vmem [#allocation5], %s132
          %s134 = smul.u32 4, %s15
          %s136 = ssub.s32 8192, 8192
          %137 = vsyncadd %s130, %s136
          %s138 = smul.addr %s134, 128
          %s139 = scalar_lea.hbm %s1, %s138
          %s140 = sshll.u32 %s133, 4
          %s141 = int_to_ptr.vmem [resolvable:$true] %s140
          %146 = dma.hbm_to_vmem [thread:$0]  %s139, 8192, %s141, %s130, 1024, 512, 32
        $region24: #{tpu_custom_call.1} parent=15 // pred_fallthru
          _
      $region16: #{tpu_custom_call.1} parent=5 // pred_fallthru
        _
      %p147 = scmp.le.s32.totalorder 1, %s15
      %p148 = scmp.lt.s32.totalorder %s15, 3
      %p149 = pnand %p147, %p148
      %p150 = pneg %p149
      // Predicated region
      $region25: #{tpu_custom_call.1} parent=5 // pred_check
        _
      $region26: #{tpu_custom_call.1} parent=5 // pred_check_branch
        %152 = sbr.rel (%p149) target = $region28
      $region27: #{tpu_custom_call.1} parent=5 // pred_region
        %s153 = ssub.s32 %s15, 1
        %s154 = sand.u32 %s28, 1
        %s155 = scalar_lea.sflag [#allocation3], %s154
        %s156 = sand.u32 %s28, 1
        %s157 = smul.addr %s156, 32
        %s158 = scalar_lea.vmem [#allocation2], %s157
        // Predicated region
        $region29: #{tpu_custom_call.1} parent=27 // pred_check
          %p159 = pneg %p41
        $region30: #{tpu_custom_call.1} parent=27 // pred_check_branch
          %161 = sbr.rel (%p159) target = $region32
        $region31: #{tpu_custom_call.1} parent=27 // pred_region
          %162 = dma.done %s155, 512
        $region32: #{tpu_custom_call.1} parent=27 // pred_fallthru
          _
        %s163 = sand.u32 %s54, 1
        %s164 = scalar_lea.sflag [#allocation6], %s163
        %s165 = sand.u32 %s54, 1
        %s166 = smul.addr %s165, 512
        %s167 = scalar_lea.vmem [#allocation5], %s166
        // Predicated region
        $region33: #{tpu_custom_call.1} parent=27 // pred_check
          %p168 = pneg %p67
        $region34: #{tpu_custom_call.1} parent=27 // pred_check_branch
          %170 = sbr.rel (%p168) target = $region36
        $region35: #{tpu_custom_call.1} parent=27 // pred_region
          %171 = dma.done %s164, 8192
        $region36: #{tpu_custom_call.1} parent=27 // pred_fallthru
          _
        %s172 = sand.u32 %s28, 1
        %s173 = scalar_lea.sflag [#allocation3], %s172
        %s174 = sand.u32 %s28, 1
        %s175 = smul.addr %s174, 32
        %s176 = scalar_lea.vmem [#allocation2], %s175
        %p177 = pneg %p41
        %p178 = pneg %p38
        %s179 = sand.u32 %s54, 1
        %s180 = scalar_lea.sflag [#allocation6], %s179
        %s181 = sand.u32 %s54, 1
        %s182 = smul.addr %s181, 512
        %s183 = scalar_lea.vmem [#allocation5], %s182
        %p184 = pneg %p67
        %p185 = pneg %p64
        %p186 = pneg %p88
        %p187 = pneg %p85
        %s188 = smul.u32 4, %s20
        %s189 = smul.u32 4, %s20
        %p190 = scmp.eq.s32.totalorder %s20, 0
        // Predicated region
        $region37: #{tpu_custom_call.1} parent=27 // pred_check
          %p191 = pneg %p190
        $region38: #{tpu_custom_call.1} parent=27 // pred_check_branch
          %193 = sbr.rel (%p191) target = $region40
        $region39: #{tpu_custom_call.1} parent=27 // pred_region
          %194 = vst [vmem:[#allocation7] sm:$0xff] 0.0
        $region40: #{tpu_custom_call.1} parent=27 // pred_fallthru
          _
        %v195 = vld [vmem:[#allocation7] sm:$0xff]
        %v196 = vld [vmem:[%s158] sm:$0xff]
        %v197 = vld [vmem:[%s158 + $0x8] sm:$0xff]
        %v198 = vld [vmem:[%s158 + $0x10] sm:$0xff]
        %v199 = vld [vmem:[%s158 + $0x18] sm:$0xff]
        %v200 = vld [vmem:[%s167] sm:$0xff]
        %v201 = vld [vmem:[%s167 + $0x8] sm:$0xff]
        %v202 = vld [vmem:[%s167 + $0x10] sm:$0xff]
        %v203 = vld [vmem:[%s167 + $0x18] sm:$0xff]
        %v204 = vld [vmem:[%s167 + $0x20] sm:$0xff]
        %v205 = vld [vmem:[%s167 + $0x28] sm:$0xff]
        %v206 = vld [vmem:[%s167 + $0x30] sm:$0xff]
        %v207 = vld [vmem:[%s167 + $0x38] sm:$0xff]
        %v208 = vld [vmem:[%s167 + $0x40] sm:$0xff]
        %v209 = vld [vmem:[%s167 + $0x48] sm:$0xff]
        %v210 = vld [vmem:[%s167 + $0x50] sm:$0xff]
        %v211 = vld [vmem:[%s167 + $0x58] sm:$0xff]
        %v212 = vld [vmem:[%s167 + $0x60] sm:$0xff]
        %v213 = vld [vmem:[%s167 + $0x68] sm:$0xff]
        %v214 = vld [vmem:[%s167 + $0x70] sm:$0xff]
        %v215 = vld [vmem:[%s167 + $0x78] sm:$0xff]
        %v216 = vld [vmem:[%s167 + $0x80] sm:$0xff]
        %v217 = vld [vmem:[%s167 + $0x88] sm:$0xff]
        %v218 = vld [vmem:[%s167 + $0x90] sm:$0xff]
        %v219 = vld [vmem:[%s167 + $0x98] sm:$0xff]
        %v220 = vld [vmem:[%s167 + $0xa0] sm:$0xff]
        %v221 = vld [vmem:[%s167 + $0xa8] sm:$0xff]
        %v222 = vld [vmem:[%s167 + $0xb0] sm:$0xff]
        %v223 = vld [vmem:[%s167 + $0xb8] sm:$0xff]
        %v224 = vld [vmem:[%s167 + $0xc0] sm:$0xff]
        %v225 = vld [vmem:[%s167 + $0xc8] sm:$0xff]
        %v226 = vld [vmem:[%s167 + $0xd0] sm:$0xff]
        %v227 = vld [vmem:[%s167 + $0xd8] sm:$0xff]
        %v228 = vld [vmem:[%s167 + $0xe0] sm:$0xff]
        %v229 = vld [vmem:[%s167 + $0xe8] sm:$0xff]
        %v230 = vld [vmem:[%s167 + $0xf0] sm:$0xff]
        %v231 = vld [vmem:[%s167 + $0xf8] sm:$0xff]
        %v232 = vld [vmem:[%s167 + $0x100] sm:$0xff]
        %v233 = vld [vmem:[%s167 + $0x108] sm:$0xff]
        %v234 = vld [vmem:[%s167 + $0x110] sm:$0xff]
        %v235 = vld [vmem:[%s167 + $0x118] sm:$0xff]
        %v236 = vld [vmem:[%s167 + $0x120] sm:$0xff]
        %v237 = vld [vmem:[%s167 + $0x128] sm:$0xff]
        %v238 = vld [vmem:[%s167 + $0x130] sm:$0xff]
        %v239 = vld [vmem:[%s167 + $0x138] sm:$0xff]
        %v240 = vld [vmem:[%s167 + $0x140] sm:$0xff]
        %v241 = vld [vmem:[%s167 + $0x148] sm:$0xff]
        %v242 = vld [vmem:[%s167 + $0x150] sm:$0xff]
        %v243 = vld [vmem:[%s167 + $0x158] sm:$0xff]
        %v244 = vld [vmem:[%s167 + $0x160] sm:$0xff]
        %v245 = vld [vmem:[%s167 + $0x168] sm:$0xff]
        %v246 = vld [vmem:[%s167 + $0x170] sm:$0xff]
        %v247 = vld [vmem:[%s167 + $0x178] sm:$0xff]
        %v248 = vld [vmem:[%s167 + $0x180] sm:$0xff]
        %v249 = vld [vmem:[%s167 + $0x188] sm:$0xff]
        %v250 = vld [vmem:[%s167 + $0x190] sm:$0xff]
        %v251 = vld [vmem:[%s167 + $0x198] sm:$0xff]
        %v252 = vld [vmem:[%s167 + $0x1a0] sm:$0xff]
        %v253 = vld [vmem:[%s167 + $0x1a8] sm:$0xff]
        %v254 = vld [vmem:[%s167 + $0x1b0] sm:$0xff]
        %v255 = vld [vmem:[%s167 + $0x1b8] sm:$0xff]
        %v256 = vld [vmem:[%s167 + $0x1c0] sm:$0xff]
        %v257 = vld [vmem:[%s167 + $0x1c8] sm:$0xff]
        %v258 = vld [vmem:[%s167 + $0x1d0] sm:$0xff]
        %v259 = vld [vmem:[%s167 + $0x1d8] sm:$0xff]
        %v260 = vld [vmem:[%s167 + $0x1e0] sm:$0xff]
        %v261 = vld [vmem:[%s167 + $0x1e8] sm:$0xff]
        %v262 = vld [vmem:[%s167 + $0x1f0] sm:$0xff]
        %v263 = vld [vmem:[%s167 + $0x1f8] sm:$0xff]
        %264 = vmatprep.subr.mxu0 %v201
        %265 = vmatpush1.xpose.msra.mxu0 %v200
        %266 = vmatprep.subr.mxu0 %v205
        %267 = vmatpush1.xpose.msra.mxu0 %v204
        %268 = vmatprep.subr.mxu0 %v209
        %269 = vmatpush1.xpose.msra.mxu0 %v208
        %270 = vmatprep.subr.mxu0 %v213
        %271 = vmatpush1.xpose.msra.mxu0 %v212
        %272 = vmatprep.subr.mxu0 %v217
        %273 = vmatpush1.xpose.msra.mxu0 %v216
        %274 = vmatprep.subr.mxu0 %v221
        %275 = vmatpush1.xpose.msra.mxu0 %v220
        %276 = vmatprep.subr.mxu0 %v225
        %277 = vmatpush1.xpose.msra.mxu0 %v224
        %278 = vmatprep.subr.mxu0 %v229
        %279 = vmatpush1.xpose.msra.mxu0 %v228
        %280 = vmatprep.subr.mxu0 %v233
        %281 = vmatpush1.xpose.msra.mxu0 %v232
        %282 = vmatprep.subr.mxu0 %v237
        %283 = vmatpush1.xpose.msra.mxu0 %v236
        %284 = vmatprep.subr.mxu0 %v241
        %285 = vmatpush1.xpose.msra.mxu0 %v240
        %286 = vmatprep.subr.mxu0 %v245
        %287 = vmatpush1.xpose.msra.mxu0 %v244
        %288 = vmatprep.subr.mxu0 %v249
        %289 = vmatpush1.xpose.msra.mxu0 %v248
        %290 = vmatprep.subr.mxu0 %v253
        %291 = vmatpush1.xpose.msra.mxu0 %v252
        %292 = vmatprep.subr.mxu0 %v257
        %293 = vmatpush1.xpose.msra.mxu0 %v256
        %294 = vmatprep.subr.mxu0 %v261
        %295 = vmatpush1.xpose.msra.mxu0 %v260
        %296 = vmatprep.subr.mxu0 0.0
        %297 = vmatpush1.xpose.msra.mxu0 0.0
        %298 = vmatprep.subr.mxu0 0.0
        %299 = vmatpush1.xpose.msra.mxu0 0.0
        %300 = vmatprep.subr.mxu0 0.0
        %301 = vmatpush1.xpose.msra.mxu0 0.0
        %302 = vmatprep.subr.mxu0 0.0
        %303 = vmatpush1.xpose.msra.mxu0 0.0
        %304 = vmatprep.subr.mxu0 0.0
        %305 = vmatpush1.xpose.msra.mxu0 0.0
        %306 = vmatprep.subr.mxu0 0.0
        %307 = vmatpush1.xpose.msra.mxu0 0.0
        %308 = vmatprep.subr.mxu0 0.0
        %309 = vmatpush1.xpose.msra.mxu0 0.0
        %310 = vmatprep.subr.mxu0 0.0
        %311 = vmatpush1.xpose.msra.mxu0 0.0
        %312 = vmatprep.subr.mxu0 0.0
        %313 = vmatpush1.xpose.msra.mxu0 0.0
        %314 = vmatprep.subr.mxu0 0.0
        %315 = vmatpush1.xpose.msra.mxu0 0.0
        %316 = vmatprep.subr.mxu0 0.0
        %317 = vmatpush1.xpose.msra.mxu0 0.0
        %318 = vmatprep.subr.mxu0 0.0
        %319 = vmatpush1.xpose.msra.mxu0 0.0
        %320 = vmatprep.subr.mxu0 0.0
        %321 = vmatpush1.xpose.msra.mxu0 0.0
        %322 = vmatprep.subr.mxu0 0.0
        %323 = vmatpush1.xpose.msra.mxu0 0.0
        %324 = vmatprep.subr.mxu0 0.0
        %325 = vmatpush1.xpose.msra.mxu0 0.0
        %326 = vmatprep.subr.mxu0 0.0
        %327 = vmatpush1.xpose.msra.mxu0 0.0
        %328 = vmatprep.mubr.f32.mxu0 %v197
        %329 = vmatmul.mubr.f32.gmra.mrb[0].mxu0 %v196
        %v330 = vpop.f32.mrb[0].mxu0
        %v331 = vadd.f32 0.0, %v330
        %v332 = vpop.f32.mrb[0].mxu0
        %333 = vdwg.mxu0
        %334 = vmatprep.subr.mxu0 %v203
        %335 = vmatpush1.xpose.msra.mxu0 %v202
        %336 = vmatprep.subr.mxu0 %v207
        %337 = vmatpush1.xpose.msra.mxu0 %v206
        %338 = vmatprep.subr.mxu0 %v211
        %339 = vmatpush1.xpose.msra.mxu0 %v210
        %340 = vmatprep.subr.mxu0 %v215
        %341 = vmatpush1.xpose.msra.mxu0 %v214
        %342 = vmatprep.subr.mxu0 %v219
        %343 = vmatpush1.xpose.msra.mxu0 %v218
        %344 = vmatprep.subr.mxu0 %v223
        %345 = vmatpush1.xpose.msra.mxu0 %v222
        %346 = vmatprep.subr.mxu0 %v227
        %347 = vmatpush1.xpose.msra.mxu0 %v226
        %348 = vmatprep.subr.mxu0 %v231
        %349 = vmatpush1.xpose.msra.mxu0 %v230
        %350 = vmatprep.subr.mxu0 %v235
        %351 = vmatpush1.xpose.msra.mxu0 %v234
        %352 = vmatprep.subr.mxu0 %v239
        %353 = vmatpush1.xpose.msra.mxu0 %v238
        %354 = vmatprep.subr.mxu0 %v243
        %355 = vmatpush1.xpose.msra.mxu0 %v242
        %356 = vmatprep.subr.mxu0 %v247
        %357 = vmatpush1.xpose.msra.mxu0 %v246
        %358 = vmatprep.subr.mxu0 %v251
        %359 = vmatpush1.xpose.msra.mxu0 %v250
        %360 = vmatprep.subr.mxu0 %v255
        %361 = vmatpush1.xpose.msra.mxu0 %v254
        %362 = vmatprep.subr.mxu0 %v259
        %363 = vmatpush1.xpose.msra.mxu0 %v258
        %364 = vmatprep.subr.mxu0 %v263
        %365 = vmatpush1.xpose.msra.mxu0 %v262
        %366 = vmatprep.subr.mxu0 0.0
        %367 = vmatpush1.xpose.msra.mxu0 0.0
        %368 = vmatprep.subr.mxu0 0.0
        %369 = vmatpush1.xpose.msra.mxu0 0.0
        %370 = vmatprep.subr.mxu0 0.0
        %371 = vmatpush1.xpose.msra.mxu0 0.0
        %372 = vmatprep.subr.mxu0 0.0
        %373 = vmatpush1.xpose.msra.mxu0 0.0
        %374 = vmatprep.subr.mxu0 0.0
        %375 = vmatpush1.xpose.msra.mxu0 0.0
        %376 = vmatprep.subr.mxu0 0.0
        %377 = vmatpush1.xpose.msra.mxu0 0.0
        %378 = vmatprep.subr.mxu0 0.0
        %379 = vmatpush1.xpose.msra.mxu0 0.0
        %380 = vmatprep.subr.mxu0 0.0
        %381 = vmatpush1.xpose.msra.mxu0 0.0
        %382 = vmatprep.subr.mxu0 0.0
        %383 = vmatpush1.xpose.msra.mxu0 0.0
        %384 = vmatprep.subr.mxu0 0.0
        %385 = vmatpush1.xpose.msra.mxu0 0.0
        %386 = vmatprep.subr.mxu0 0.0
        %387 = vmatpush1.xpose.msra.mxu0 0.0
        %388 = vmatprep.subr.mxu0 0.0
        %389 = vmatpush1.xpose.msra.mxu0 0.0
        %390 = vmatprep.subr.mxu0 0.0
        %391 = vmatpush1.xpose.msra.mxu0 0.0
        %392 = vmatprep.subr.mxu0 0.0
        %393 = vmatpush1.xpose.msra.mxu0 0.0
        %394 = vmatprep.subr.mxu0 0.0
        %395 = vmatpush1.xpose.msra.mxu0 0.0
        %396 = vmatprep.subr.mxu0 0.0
        %397 = vmatpush1.xpose.msra.mxu0 0.0
        %398 = vmatprep.mubr.f32.mxu0 %v199
        %399 = vmatmul.mubr.f32.gmra.mrb[0].mxu0 %v198
        %v400 = vpop.f32.mrb[0].mxu0
        %v401 = vadd.f32 %v331, %v400
        %v402 = vpop.f32.mrb[0].mxu0
        %403 = vdwg.mxu0
        %v404 = vadd.f32 %v195, %v401
        %405 = vst [vmem:[#allocation7] sm:$0xff] %v404
        // Predicated region
        $region41: #{tpu_custom_call.1} parent=27 // pred_check
          %p406 = pneg %p85
        $region42: #{tpu_custom_call.1} parent=27 // pred_check_branch
          %408 = sbr.rel (%p406) target = $region44
        $region43: #{tpu_custom_call.1} parent=27 // pred_region
          %s410 = ssub.s32 128, 128
          %411 = vsyncadd [#allocation4], %s410
          %s413 = sshll.u32 [#allocation7], 4
          %s414 = int_to_ptr.vmem [resolvable:$true] %s413
          %416 = dma.vmem_to_hbm [thread:$0]  %s414, 128, %s2, [#allocation4]
        $region44: #{tpu_custom_call.1} parent=27 // pred_fallthru
          _
        // Predicated region
        $region45: #{tpu_custom_call.1} parent=27 // pred_check
          %p417 = pneg %p85
        $region46: #{tpu_custom_call.1} parent=27 // pred_check_branch
          %419 = sbr.rel (%p417) target = $region48
        $region47: #{tpu_custom_call.1} parent=27 // pred_region
          %420 = dma.done [#allocation4], 128
        $region48: #{tpu_custom_call.1} parent=27 // pred_fallthru
          _
      $region28: #{tpu_custom_call.1} parent=5 // pred_fallthru
        _
      %p421 = scmp.le.s32.totalorder 2, %s15
      // Predicated region
      $region49: #{tpu_custom_call.1} parent=5 // pred_check
        %p422 = pneg %p421
      $region50: #{tpu_custom_call.1} parent=5 // pred_check_branch
        %424 = sbr.rel (%p422) target = $region52
      $region51: #{tpu_custom_call.1} parent=5 // pred_region
        %s425 = ssub.s32 %s15, 2
      $region52: #{tpu_custom_call.1} parent=5 // pred_fallthru
        _
    $region6: #{tpu_custom_call.1} parent=1 // loop_footer
      %s19 = sadd.s32 1, %s15
    $region7: #{tpu_custom_call.1} parent=1 // loop_footer_branch
      %14 = sbr.rel target = $region3
    $region8: #{tpu_custom_call.1} parent=1 // loop_exit
      _
    %426 = vsyncpa [#allocation3], 1
    %s427 = scalar_lea.sflag [#allocation3], 1
    %428 = vsyncpa %s427, 1
    %429 = vsyncpa [#allocation6], 1
    %s430 = scalar_lea.sflag [#allocation6], 1
    %431 = vsyncpa %s430, 1
    %432 = vsyncpa [#allocation4], 1
    %s433 = scalar_lea.sflag [#allocation4], 1
    %434 = vsyncpa %s433, 1

</llo_original>
